<compile_context>
chip_gen: v5e
topology: v5e:2x2
jax: 0.10.0
libtpu: 0.0.40
codegen_flags: <defaults>
</compile_context>

<pallas_src>
import functools

import jax
import jax.numpy as jnp
from jax.experimental import pallas as pl
from jax.experimental.pallas import tpu as pltpu

_SQRT_2_OVER_PI = 0.7978845608028654


def _head_transform_kernel(x_ref, w_ref, b_ref, g_ref, beta_ref, o_ref, *,
                           eps, inv_h, mm_dtype):
    # dense: x @ W^T.  W was pre-transposed to [in, out] in the wrapper, so the
    # contraction dim is the RHS sublane axis (no per-step weight transpose).
    x = x_ref[...].astype(mm_dtype)          # in-kernel cast: cheap VPU op
    y = jnp.dot(x, w_ref[...], preferred_element_type=jnp.float32)
    y = y + b_ref[...]                        # bias/GELU/LayerNorm math in f32

    # GELU (tanh approximation, i.e. HF "gelu_new").
    # TODO(synk): use exact erf GELU if config.hidden_act == "gelu"; the two
    # variants differ by <~1e-3 before LayerNorm.
    y = 0.5 * y * (1.0 + jnp.tanh(_SQRT_2_OVER_PI * (y + 0.044715 * y * y * y)))

    # LayerNorm over the hidden (last) dim — single pass: E[y] and E[y^2], f32.
    s = jnp.sum(y, axis=-1, keepdims=True)
    ss = jnp.sum(y * y, axis=-1, keepdims=True)
    mean = s * inv_h
    var = jnp.maximum(ss * inv_h - mean * mean, 0.0)
    norm = (y - mean) * jax.lax.rsqrt(var + eps)
    o_ref[...] = (norm * g_ref[...] + beta_ref[...]).astype(o_ref.dtype)


def _round_up(n, m):
    return (n + m - 1) // m * m


def _vmem_capacity_bytes():
    try:
        return int(pltpu.get_tpu_info().vmem_capacity_bytes)
    except Exception:
        return 64 << 20   # assume the smallest generation (v7x) if unqueryable


def _pick_tile_m(M, H, x_item, mm_item, out_item, budget, tile_cap):
    """Largest aligned M-tile whose pipelined buffers + scratch fit the budget."""
    # 2x double-buffered x + out tiles, plus in-kernel mm-cast and f32
    # matmul/GELU intermediates (~2 live f32 [tile, H] tensors).
    per_row = H * (2 * x_item + 2 * out_item + mm_item + 2 * 4)
    # Weight + LN vectors (assume double-buffered for a conservative budget).
    fixed = 2 * H * H * mm_item + 2 * 3 * H * 4
    avail = max(budget - fixed, per_row * 8)
    tile = min(avail // per_row, tile_cap)
    if tile >= 256:
        tile = tile // 256 * 256              # fill full MXU rows
    else:
        tile = max(tile // 8 * 8, 8)
    tile = int(min(tile, _round_up(M, 8)))
    # Keep >= 2 grid steps so v7x's second TensorCore gets work on the
    # "parallel" axis (per-step overhead ~0.35us -> negligible on v5e/v6e).
    if M > 8 and tile >= M:
        tile = max(_round_up(pl.cdiv(M, 2), 8), 8)
    return tile


def geo_bert_prediction_head_transform(x, weight, bias, gamma, beta, *,
                                       eps=1e-12, tile_m=None,
                                       matmul_dtype=None, out_dtype=None):
    """Fused dense -> GELU -> LayerNorm.

    x:      [B, S, H] activations (kept in native dtype in HBM).
    weight: [H, H] in PyTorch nn.Linear layout ([out_features, in_features]).
    bias, gamma, beta: [H].
    matmul_dtype: MXU operand dtype. Defaults to bf16 when x is f32 (the MXU
        is bf16-native on v5e/v6e/v7x); accumulation and all elementwise math
        stay in f32.
    out_dtype: output dtype (defaults to x.dtype; pass bf16 to halve HBM
        writes if downstream tolerates it).
    """
    B, S, H = x.shape
    M = B * S
    out_dtype = jnp.dtype(out_dtype) if out_dtype is not None else jnp.dtype(x.dtype)

    if matmul_dtype is not None:
        mm_dtype = jnp.dtype(matmul_dtype)
    elif jnp.dtype(x.dtype) == jnp.float32:
        mm_dtype = jnp.dtype(jnp.bfloat16)    # default fast path on all gens
    else:
        mm_dtype = jnp.dtype(x.dtype)

    x_item = jnp.dtype(x.dtype).itemsize
    mm_item = mm_dtype.itemsize
    out_item = out_dtype.itemsize

    # Generation-aware VMEM budget: ~0.75x physical, capped at 100 MiB.
    capacity = _vmem_capacity_bytes()
    limit_cap = min(capacity * 3 // 4, 100 << 20)
    budget = max(limit_cap - (4 << 20), 16 << 20)
    tile_cap = 2048 if capacity >= (100 << 20) else 1024

    if tile_m is None:
        tile_m = _pick_tile_m(M, H, x_item, mm_item, out_item, budget, tile_cap)

    grid_m = pl.cdiv(M, tile_m)               # ragged last block handled by Pallas

    x2d = x.reshape(M, H)                     # native dtype: no wrapper cast pass
    w = weight.T.astype(mm_dtype)             # one-time [in, out] layout for the MXU
    b2d = bias.reshape(1, H).astype(jnp.float32)
    g2d = gamma.reshape(1, H).astype(jnp.float32)
    beta2d = beta.reshape(1, H).astype(jnp.float32)

    kernel = functools.partial(_head_transform_kernel, eps=float(eps),
                               inv_h=1.0 / H, mm_dtype=mm_dtype)

    # Scoped VMEM: x/out double buffers + weight + LN vectors + f32 + mm-cast
    # intermediates, headroom of 4 MiB, capped per generation.
    est = (2 * tile_m * H * x_item + 2 * tile_m * H * out_item
           + 2 * H * H * mm_item + 2 * 3 * H * 4
           + tile_m * H * (mm_item + 2 * 4))
    vmem_limit = int(min(max(est + (4 << 20), 32 << 20), limit_cap))

    cost = pl.CostEstimate(
        flops=2 * M * H * H,
        transcendentals=M * H,
        bytes_accessed=M * H * (x_item + out_item) + H * H * mm_item + 3 * H * 4)

    def _build(single_buffer_consts):
        const_kwargs = (dict(pipeline_mode=pl.Buffered(1))
                        if single_buffer_consts else {})
        in_specs = [
            pl.BlockSpec((tile_m, H), lambda i: (i, 0)),                # x tile
            pl.BlockSpec((H, H), lambda i: (0, 0), **const_kwargs),     # W^T (resident)
            pl.BlockSpec((1, H), lambda i: (0, 0), **const_kwargs),     # bias
            pl.BlockSpec((1, H), lambda i: (0, 0), **const_kwargs),     # LN gamma
            pl.BlockSpec((1, H), lambda i: (0, 0), **const_kwargs),     # LN beta
        ]
        return pl.pallas_call(
            kernel,
            out_shape=jax.ShapeDtypeStruct((M, H), out_dtype),
            grid_spec=pltpu.PrefetchScalarGridSpec(
                num_scalar_prefetch=0,
                grid=(grid_m,),
                in_specs=in_specs,
                out_specs=pl.BlockSpec((tile_m, H), lambda i: (i, 0)),
            ),
            compiler_params=pltpu.CompilerParams(
                dimension_semantics=("parallel",),
                vmem_limit_bytes=vmem_limit),
            cost_estimate=cost,
        )

    try:
        out2d = _build(True)(x2d, w, b2d, g2d, beta2d)
    except Exception:
        # pipeline_mode=pl.Buffered(1) not supported on this build: fall back
        # to default double-buffered constant operands (already budgeted).
        out2d = _build(False)(x2d, w, b2d, g2d, beta2d)

    return out2d.reshape(B, S, H)


if __name__ == "__main__":
    # Small config consistent with the module: hidden_size=32, layer_norm_eps=1e-12
    B, S, H = 2, 8, 32

    key = jax.random.PRNGKey(0)
    k_x, k_w, k_b, k_g, k_be = jax.random.split(key, 5)

    x = jax.random.normal(k_x, (B, S, H), dtype=jnp.float32)
    weight = jax.random.normal(k_w, (H, H), dtype=jnp.float32) * 0.02  # nn.Linear [out, in]
    bias = jax.random.normal(k_b, (H,), dtype=jnp.float32) * 0.02
    gamma = jnp.ones((H,), dtype=jnp.float32) + 0.01 * jax.random.normal(k_g, (H,), jnp.float32)
    beta = 0.01 * jax.random.normal(k_be, (H,), dtype=jnp.float32)

    # Reference in plain JAX (same math: dense -> tanh-GELU -> LayerNorm)
    y_ref = x @ weight.T + bias
    y_ref = 0.5 * y_ref * (1.0 + jnp.tanh(_SQRT_2_OVER_PI *
                                          (y_ref + 0.044715 * y_ref ** 3)))
    mu = y_ref.mean(-1, keepdims=True)
    var = ((y_ref - mu) ** 2).mean(-1, keepdims=True)
    ref = (y_ref - mu) / jnp.sqrt(var + 1e-12) * gamma + beta

    # Exact f32-operand path (tight tolerance)
    out_f32 = geo_bert_prediction_head_transform(
        x, weight, bias, gamma, beta, eps=1e-12, matmul_dtype=jnp.float32)
    out_f32 = jax.block_until_ready(out_f32)
    assert out_f32.shape == (B, S, H)
    assert jnp.max(jnp.abs(out_f32 - ref)) < 1e-4

    # Default path: bf16 MXU operands, f32 accumulation + f32 LayerNorm
    out = geo_bert_prediction_head_transform(x, weight, bias, gamma, beta, eps=1e-12)
    out = jax.block_until_ready(out)
    assert out.shape == (B, S, H)
    assert out.dtype == x.dtype
    assert jnp.max(jnp.abs(out - ref)) < 5e-2

    print("KERNEL_OK")
</pallas_src>

<mosaic_0001>
module attributes {stable_mosaic.version = 11 : i64} {
  func.func @_head_transform_kernel(%arg0: i32, %arg1: memref<8x32xf32, #tpu.memory_space<vmem>>, %arg2: memref<32x32xf32, #tpu.memory_space<vmem>>, %arg3: memref<1x32xf32, #tpu.memory_space<vmem>>, %arg4: memref<1x32xf32, #tpu.memory_space<vmem>>, %arg5: memref<1x32xf32, #tpu.memory_space<vmem>>, %arg6: memref<8x32xf32, #tpu.memory_space<vmem>>) attributes {dimension_semantics = [#tpu.dimension_semantics<parallel>], iteration_bounds = array<i64: 2>, scalar_prefetch = 0 : i64, scratch_operands = 0 : i64, tpu.core_type = #tpu.core_type<tc>, window_params = [{transform_indices = @transform_0, window_bounds = array<i64: 8, 32>}, {pipeline_mode = #tpu.pipeline_mode<synchronous>, transform_indices = @transform_1, window_bounds = array<i64: 32, 32>}, {pipeline_mode = #tpu.pipeline_mode<synchronous>, transform_indices = @transform_2, window_bounds = array<i64: 1, 32>}, {pipeline_mode = #tpu.pipeline_mode<synchronous>, transform_indices = @transform_3, window_bounds = array<i64: 1, 32>}, {pipeline_mode = #tpu.pipeline_mode<synchronous>, transform_indices = @transform_4, window_bounds = array<i64: 1, 32>}, {transform_indices = @transform_5, window_bounds = array<i64: 8, 32>}]} {
    %c0 = arith.constant 0 : index
    %c0_0 = arith.constant 0 : index
    %0 = vector.load %arg1[%c0, %c0_0] : memref<8x32xf32, #tpu.memory_space<vmem>>, vector<8x32xf32>
    %c0_1 = arith.constant 0 : index
    %c0_2 = arith.constant 0 : index
    %1 = vector.load %arg2[%c0_1, %c0_2] : memref<32x32xf32, #tpu.memory_space<vmem>>, vector<32x32xf32>
    %cst = arith.constant dense<0.000000e+00> : vector<8x32xf32>
    %2 = tpu.matmul %0, %1, %cst {dimension_numbers = #tpu.dot_dimension_numbers<[1], [0], [0], [1], [0, 0, 1, 1], [], []>} : vector<8x32xf32>, vector<32x32xf32>, vector<8x32xf32> -> vector<8x32xf32>
    %c0_3 = arith.constant 0 : index
    %c0_4 = arith.constant 0 : index
    %3 = vector.load %arg3[%c0_3, %c0_4] : memref<1x32xf32, #tpu.memory_space<vmem>>, vector<1x32xf32>
    %4 = vector.broadcast %3 : vector<1x32xf32> to vector<8x32xf32>
    %5 = arith.addf %2, %4 : vector<8x32xf32>
    %cst_5 = arith.constant 5.000000e-01 : f32
    %6 = vector.broadcast %cst_5 : f32 to vector<8x32xf32>
    %7 = arith.mulf %6, %5 : vector<8x32xf32>
    %cst_6 = arith.constant 4.471500e-02 : f32
    %8 = vector.broadcast %cst_6 : f32 to vector<8x32xf32>
    %9 = arith.mulf %8, %5 : vector<8x32xf32>
    %10 = arith.mulf %9, %5 : vector<8x32xf32>
    %11 = arith.mulf %10, %5 : vector<8x32xf32>
    %12 = arith.addf %5, %11 : vector<8x32xf32>
    %cst_7 = arith.constant 0.797884583 : f32
    %13 = vector.broadcast %cst_7 : f32 to vector<8x32xf32>
    %14 = arith.mulf %13, %12 : vector<8x32xf32>
    %15 = math.tanh %14 : vector<8x32xf32>
    %cst_8 = arith.constant 1.000000e+00 : f32
    %16 = vector.broadcast %cst_8 : f32 to vector<8x32xf32>
    %17 = arith.addf %16, %15 : vector<8x32xf32>
    %18 = arith.mulf %7, %17 : vector<8x32xf32>
    %cst_9 = arith.constant dense<0.000000e+00> : vector<8xf32>
    %19 = vector.multi_reduction <add>, %18, %cst_9 [1] : vector<8x32xf32> to vector<8xf32>
    %20 = vector.shape_cast %19 : vector<8xf32> to vector<8x1xf32>
    %21 = arith.mulf %18, %18 : vector<8x32xf32>
    %cst_10 = arith.constant dense<0.000000e+00> : vector<8xf32>
    %22 = vector.multi_reduction <add>, %21, %cst_10 [1] : vector<8x32xf32> to vector<8xf32>
    %23 = vector.shape_cast %22 : vector<8xf32> to vector<8x1xf32>
    %cst_11 = arith.constant 3.125000e-02 : f32
    %24 = vector.broadcast %cst_11 : f32 to vector<8x1xf32>
    %25 = arith.mulf %20, %24 : vector<8x1xf32>
    %cst_12 = arith.constant 3.125000e-02 : f32
    %26 = vector.broadcast %cst_12 : f32 to vector<8x1xf32>
    %27 = arith.mulf %23, %26 : vector<8x1xf32>
    %28 = arith.mulf %25, %25 : vector<8x1xf32>
    %29 = arith.subf %27, %28 : vector<8x1xf32>
    %cst_13 = arith.constant 0.000000e+00 : f32
    %30 = vector.broadcast %cst_13 : f32 to vector<8x1xf32>
    %31 = arith.maximumf %29, %30 : vector<8x1xf32>
    %32 = vector.broadcast %25 : vector<8x1xf32> to vector<8x32xf32>
    %33 = arith.subf %18, %32 : vector<8x32xf32>
    %cst_14 = arith.constant 9.99999996E-13 : f32
    %34 = vector.broadcast %cst_14 : f32 to vector<8x1xf32>
    %35 = arith.addf %31, %34 : vector<8x1xf32>
    %36 = math.rsqrt %35 : vector<8x1xf32>
    %37 = vector.broadcast %36 : vector<8x1xf32> to vector<8x32xf32>
    %38 = arith.mulf %33, %37 : vector<8x32xf32>
    %c0_15 = arith.constant 0 : index
    %c0_16 = arith.constant 0 : index
    %39 = vector.load %arg4[%c0_15, %c0_16] : memref<1x32xf32, #tpu.memory_space<vmem>>, vector<1x32xf32>
    %40 = vector.broadcast %39 : vector<1x32xf32> to vector<8x32xf32>
    %41 = arith.mulf %38, %40 : vector<8x32xf32>
    %c0_17 = arith.constant 0 : index
    %c0_18 = arith.constant 0 : index
    %42 = vector.load %arg5[%c0_17, %c0_18] : memref<1x32xf32, #tpu.memory_space<vmem>>, vector<1x32xf32>
    %43 = vector.broadcast %42 : vector<1x32xf32> to vector<8x32xf32>
    %44 = arith.addf %41, %43 : vector<8x32xf32>
    %c0_19 = arith.constant 0 : index
    %c0_20 = arith.constant 0 : index
    %45 = vector.load %arg6[%c0_19, %c0_20] : memref<8x32xf32, #tpu.memory_space<vmem>>, vector<8x32xf32>
    tpu.vector_store %arg6[%c0_19, %c0_20], %44 {strides = array<i32>} : memref<8x32xf32, #tpu.memory_space<vmem>>, vector<8x32xf32>,
    return
  }
  func.func @transform_0(%arg0: i32) -> (i32, i32) {
    %c0_i32 = arith.constant 0 : i32
    %c0_i32_0 = arith.constant 0 : i32
    return %arg0, %c0_i32 : i32, i32
  }
  func.func @transform_1(%arg0: i32) -> (i32, i32) {
    %c0_i32 = arith.constant 0 : i32
    %c0_i32_0 = arith.constant 0 : i32
    %c0_i32_1 = arith.constant 0 : i32
    return %c0_i32, %c0_i32_0 : i32, i32
  }
  func.func @transform_2(%arg0: i32) -> (i32, i32) {
    %c0_i32 = arith.constant 0 : i32
    %c0_i32_0 = arith.constant 0 : i32
    %c0_i32_1 = arith.constant 0 : i32
    return %c0_i32, %c0_i32_0 : i32, i32
  }
  func.func @transform_3(%arg0: i32) -> (i32, i32) {
    %c0_i32 = arith.constant 0 : i32
    %c0_i32_0 = arith.constant 0 : i32
    %c0_i32_1 = arith.constant 0 : i32
    return %c0_i32, %c0_i32_0 : i32, i32
  }
  func.func @transform_4(%arg0: i32) -> (i32, i32) {
    %c0_i32 = arith.constant 0 : i32
    %c0_i32_0 = arith.constant 0 : i32
    %c0_i32_1 = arith.constant 0 : i32
    return %c0_i32, %c0_i32_0 : i32, i32
  }
  func.func @transform_5(%arg0: i32) -> (i32, i32) {
    %c0_i32 = arith.constant 0 : i32
    %c0_i32_0 = arith.constant 0 : i32
    return %arg0, %c0_i32 : i32, i32
  }
}

module attributes {stable_mosaic.version = 11 : i64} {
  func.func @_head_transform_kernel(%arg0: i32, %arg1: memref<8x32xf32, #tpu.memory_space<vmem>>, %arg2: memref<32x32xf32, #tpu.memory_space<vmem>>, %arg3: memref<1x32xf32, #tpu.memory_space<vmem>>, %arg4: memref<1x32xf32, #tpu.memory_space<vmem>>, %arg5: memref<1x32xf32, #tpu.memory_space<vmem>>, %arg6: memref<8x32xf32, #tpu.memory_space<vmem>>) attributes {dimension_semantics = [#tpu.dimension_semantics<parallel>], iteration_bounds = array<i64: 2>, scalar_prefetch = 0 : i64, scratch_operands = 0 : i64, tpu.core_type = #tpu.core_type<tc>, window_params = [{transform_indices = @transform_0, window_bounds = array<i64: 8, 32>}, {pipeline_mode = #tpu.pipeline_mode<synchronous>, transform_indices = @transform_1, window_bounds = array<i64: 32, 32>}, {pipeline_mode = #tpu.pipeline_mode<synchronous>, transform_indices = @transform_2, window_bounds = array<i64: 1, 32>}, {pipeline_mode = #tpu.pipeline_mode<synchronous>, transform_indices = @transform_3, window_bounds = array<i64: 1, 32>}, {pipeline_mode = #tpu.pipeline_mode<synchronous>, transform_indices = @transform_4, window_bounds = array<i64: 1, 32>}, {transform_indices = @transform_5, window_bounds = array<i64: 8, 32>}]} {
    %c0 = arith.constant 0 : index
    %c0_0 = arith.constant 0 : index
    %0 = vector.load %arg1[%c0, %c0_0] : memref<8x32xf32, #tpu.memory_space<vmem>>, vector<8x32xf32>
    %c0_1 = arith.constant 0 : index
    %c0_2 = arith.constant 0 : index
    %1 = vector.load %arg2[%c0_1, %c0_2] : memref<32x32xf32, #tpu.memory_space<vmem>>, vector<32x32xf32>
    %cst = arith.constant dense<0.000000e+00> : vector<8x32xf32>
    %2 = tpu.matmul %0, %1, %cst {dimension_numbers = #tpu.dot_dimension_numbers<[1], [0], [0], [1], [0, 0, 1, 1], [], []>} : vector<8x32xf32>, vector<32x32xf32>, vector<8x32xf32> -> vector<8x32xf32>
    %c0_3 = arith.constant 0 : index
    %c0_4 = arith.constant 0 : index
    %3 = vector.load %arg3[%c0_3, %c0_4] : memref<1x32xf32, #tpu.memory_space<vmem>>, vector<1x32xf32>
    %4 = vector.broadcast %3 : vector<1x32xf32> to vector<8x32xf32>
    %5 = arith.addf %2, %4 : vector<8x32xf32>
    %cst_5 = arith.constant 5.000000e-01 : f32
    %6 = vector.broadcast %cst_5 : f32 to vector<8x32xf32>
    %7 = arith.mulf %6, %5 : vector<8x32xf32>
    %cst_6 = arith.constant 4.471500e-02 : f32
    %8 = vector.broadcast %cst_6 : f32 to vector<8x32xf32>
    %9 = arith.mulf %8, %5 : vector<8x32xf32>
    %10 = arith.mulf %9, %5 : vector<8x32xf32>
    %11 = arith.mulf %10, %5 : vector<8x32xf32>
    %12 = arith.addf %5, %11 : vector<8x32xf32>
    %cst_7 = arith.constant 0.797884583 : f32
    %13 = vector.broadcast %cst_7 : f32 to vector<8x32xf32>
    %14 = arith.mulf %13, %12 : vector<8x32xf32>
    %15 = math.tanh %14 : vector<8x32xf32>
    %cst_8 = arith.constant 1.000000e+00 : f32
    %16 = vector.broadcast %cst_8 : f32 to vector<8x32xf32>
    %17 = arith.addf %16, %15 : vector<8x32xf32>
    %18 = arith.mulf %7, %17 : vector<8x32xf32>
    %cst_9 = arith.constant dense<0.000000e+00> : vector<8xf32>
    %19 = vector.multi_reduction <add>, %18, %cst_9 [1] : vector<8x32xf32> to vector<8xf32>
    %20 = vector.shape_cast %19 : vector<8xf32> to vector<8x1xf32>
    %21 = arith.mulf %18, %18 : vector<8x32xf32>
    %cst_10 = arith.constant dense<0.000000e+00> : vector<8xf32>
    %22 = vector.multi_reduction <add>, %21, %cst_10 [1] : vector<8x32xf32> to vector<8xf32>
    %23 = vector.shape_cast %22 : vector<8xf32> to vector<8x1xf32>
    %cst_11 = arith.constant 3.125000e-02 : f32
    %24 = vector.broadcast %cst_11 : f32 to vector<8x1xf32>
    %25 = arith.mulf %20, %24 : vector<8x1xf32>
    %cst_12 = arith.constant 3.125000e-02 : f32
    %26 = vector.broadcast %cst_12 : f32 to vector<8x1xf32>
    %27 = arith.mulf %23, %26 : vector<8x1xf32>
    %28 = arith.mulf %25, %25 : vector<8x1xf32>
    %29 = arith.subf %27, %28 : vector<8x1xf32>
    %cst_13 = arith.constant 0.000000e+00 : f32
    %30 = vector.broadcast %cst_13 : f32 to vector<8x1xf32>
    %31 = arith.maximumf %29, %30 : vector<8x1xf32>
    %32 = vector.broadcast %25 : vector<8x1xf32> to vector<8x32xf32>
    %33 = arith.subf %18, %32 : vector<8x32xf32>
    %cst_14 = arith.constant 9.99999996E-13 : f32
    %34 = vector.broadcast %cst_14 : f32 to vector<8x1xf32>
    %35 = arith.addf %31, %34 : vector<8x1xf32>
    %36 = math.rsqrt %35 : vector<8x1xf32>
    %37 = vector.broadcast %36 : vector<8x1xf32> to vector<8x32xf32>
    %38 = arith.mulf %33, %37 : vector<8x32xf32>
    %c0_15 = arith.constant 0 : index
    %c0_16 = arith.constant 0 : index
    %39 = vector.load %arg4[%c0_15, %c0_16] : memref<1x32xf32, #tpu.memory_space<vmem>>, vector<1x32xf32>
    %40 = vector.broadcast %39 : vector<1x32xf32> to vector<8x32xf32>
    %41 = arith.mulf %38, %40 : vector<8x32xf32>
    %c0_17 = arith.constant 0 : index
    %c0_18 = arith.constant 0 : index
    %42 = vector.load %arg5[%c0_17, %c0_18] : memref<1x32xf32, #tpu.memory_space<vmem>>, vector<1x32xf32>
    %43 = vector.broadcast %42 : vector<1x32xf32> to vector<8x32xf32>
    %44 = arith.addf %41, %43 : vector<8x32xf32>
    %c0_19 = arith.constant 0 : index
    %c0_20 = arith.constant 0 : index
    %45 = vector.load %arg6[%c0_19, %c0_20] : memref<8x32xf32, #tpu.memory_space<vmem>>, vector<8x32xf32>
    tpu.vector_store %arg6[%c0_19, %c0_20], %44 {strides = array<i32>} : memref<8x32xf32, #tpu.memory_space<vmem>>, vector<8x32xf32>,
    return
  }
  func.func @transform_0(%arg0: i32) -> (i32, i32) {
    %c0_i32 = arith.constant 0 : i32
    %c0_i32_0 = arith.constant 0 : i32
    return %arg0, %c0_i32 : i32, i32
  }
  func.func @transform_1(%arg0: i32) -> (i32, i32) {
    %c0_i32 = arith.constant 0 : i32
    %c0_i32_0 = arith.constant 0 : i32
    %c0_i32_1 = arith.constant 0 : i32
    return %c0_i32, %c0_i32_0 : i32, i32
  }
  func.func @transform_2(%arg0: i32) -> (i32, i32) {
    %c0_i32 = arith.constant 0 : i32
    %c0_i32_0 = arith.constant 0 : i32
    %c0_i32_1 = arith.constant 0 : i32
    return %c0_i32, %c0_i32_0 : i32, i32
  }
  func.func @transform_3(%arg0: i32) -> (i32, i32) {
    %c0_i32 = arith.constant 0 : i32
    %c0_i32_0 = arith.constant 0 : i32
    %c0_i32_1 = arith.constant 0 : i32
    return %c0_i32, %c0_i32_0 : i32, i32
  }
  func.func @transform_4(%arg0: i32) -> (i32, i32) {
    %c0_i32 = arith.constant 0 : i32
    %c0_i32_0 = arith.constant 0 : i32
    %c0_i32_1 = arith.constant 0 : i32
    return %c0_i32, %c0_i32_0 : i32, i32
  }
  func.func @transform_5(%arg0: i32) -> (i32, i32) {
    %c0_i32 = arith.constant 0 : i32
    %c0_i32_0 = arith.constant 0 : i32
    return %arg0, %c0_i32 : i32, i32
  }
}

</mosaic_0001>

<llo_original>
// kernel: tpu_custom_call.1
$region0: #{tpu_custom_call.1}
  #allocation0 [shape = 'u32[]', space=smem, size = 0x4, offset = 0x4, fixed_abs, tag = 'smem constant byte address 0x4 - core index']
  #allocation1 [shape = 'u32[72,128]{1,0:T(1,128)}', space=vmem, size = 0x9000, scoped, tag = 'internal scratch']
  %s0 = inlined_call_operand.hbm [shape: f32[16,32], index: 0, kind: input, shape index: {}]
  %s1 = inlined_call_operand.hbm [shape: f32[32,32], index: 1, kind: input, shape index: {}]
  %s2 = inlined_call_operand.vmem [shape: f32[1,32], index: 2, kind: input, shape index: {}]
  %s3 = inlined_call_operand.vmem [shape: f32[1,32], index: 3, kind: input, shape index: {}]
  %s4 = inlined_call_operand.vmem [shape: f32[1,32], index: 4, kind: input, shape index: {}]
  %s5 = inlined_call_operand.hbm [shape: f32[16,32], index: 5, kind: output, shape index: {}]
  %s6 = sld [smem:[#allocation0]]
  $region61: #{tpu_custom_call.1} parent=0
    _
  %s8 = ssub.s32 1, %s6
  %s9 = scalar_select 0, %s8, %s6
  $region1: #{tpu_custom_call.1} parent=0
    #allocation2 [shape = 'u8[8192]{0}', space=vmem, size = 0x2000, scoped, tag = 'input window, operand 0']
    #allocation3 [shape = 's32[2]{0}', space=sflag, size = 0x8, scoped, tag = 'scoped memory for tpu_custom_call.1']
    #allocation4 [shape = 's32[2]{0}', space=sflag, size = 0x8, scoped, tag = 'scoped memory for tpu_custom_call.1']
    #allocation5 [shape = 'u8[16384]{0}', space=vmem, size = 0x4000, scoped, tag = 'input window, operand 1, single buffered']
    #allocation6 [shape = 's32[1]{0}', space=sflag, size = 0x4, scoped, tag = 'scoped memory for tpu_custom_call.1']
    #allocation7 [shape = 'u8[8192]{0}', space=vmem, size = 0x2000, scoped, tag = 'output window, operand 0']
    %10 = vsyncpa [#allocation3], 0
    %s11 = scalar_lea.sflag [#allocation3], 1
    %12 = vsyncpa %s11, 0
    %13 = vsyncpa [#allocation6], 0
    %14 = vsyncpa [#allocation4], 0
    %s15 = scalar_lea.sflag [#allocation4], 1
    %16 = vsyncpa %s15, 0
    loop: start=0, step=1, limit=4
    $region2: #{tpu_custom_call.1} parent=1 // loop_pre_header
      _
    $region3: #{tpu_custom_call.1} parent=1 // loop_header
      %s18 = sphi 0, %s22
      %p19 = scmp.ge.s32.totalorder %s18, 4
      %s28 = sphi 0, %s30
      %s31 = sphi 0, %s28
      %s32 = sphi 0, %s31
      %s48 = sphi 0, %s32
      %s52 = sphi 0, %s52
      %s54 = sphi 0, %s52
      %s55 = sphi 0, %s54
      %s69 = sphi 0, %s55
      %s73 = sphi 0, %s73
      %s75 = sphi 0, %s73
      %s76 = sphi 0, %s75
      %s90 = sphi 0, %s76
      %s94 = sphi 0, %s94
      %s96 = sphi 0, %s94
      %s97 = sphi 0, %s96
      %s111 = sphi 0, %s97
      %s115 = sphi 0, %s115
      %s117 = sphi 0, %s115
      %s118 = sphi 0, %s117
      %s132 = sphi 0, %s118
      %s138 = sphi 0, %s140
      %s141 = sphi 0, %s138
      %s142 = sphi 0, %s141
      %s158 = sphi 0, %s142
    $region4: #{tpu_custom_call.1} parent=1 // loop_header_branch
      %21 = sbr.rel (%p19) target = $region8
    $region5: #{tpu_custom_call.1} parent=1 // loop_body
      %s23 = ssub.s32 %s18, 1
      %s24 = ssub.s32 %s18, 2
      %s25 = sadd.s32 %s18, 1
      %s26 = ssub.s32 %s18, %s25
      %p27 = scmp.eq.s32.totalorder %s26, 0
      %s29 = sadd.s32 %s28, 1
      %s30 = scalar_select %p27, %s28, %s29
      %p33 = pneg %p27
      %p34 = scmp.eq.s32.totalorder %s18, 1
      %p35 = por %p33, %p34
      %p36 = scmp.ne.s32.totalorder %s28, %s31
      %p37 = scmp.eq.s32.totalorder %s18, 0
      %p38 = por %p36, %p37
      %p39 = scmp.ne.s32.totalorder %s28, %s31
      %p40 = scmp.eq.s32.totalorder %s23, 1
      %p41 = por %p39, %p40
      %p42 = scmp.ne.s32.totalorder %s31, %s32
      %p43 = scmp.eq.s32.totalorder %s23, 0
      %p44 = por %p42, %p43
      %p45 = scmp.ne.s32.totalorder %s31, %s32
      %p46 = scmp.eq.s32.totalorder %s24, 1
      %p47 = por %p45, %p46
      %p49 = scmp.ne.s32.totalorder %s32, %s48
      %p50 = scmp.eq.s32.totalorder %s24, 0
      %p51 = por %p49, %p50
      %s53 = sadd.s32 %s52, 1
      %p56 = scmp.eq.s32.totalorder %s18, 1
      %p57 = scmp.ne.s32.totalorder %s52, %s54
      %p58 = scmp.eq.s32.totalorder %s18, 0
      %p59 = por %p57, %p58
      %p60 = scmp.ne.s32.totalorder %s52, %s54
      %p61 = scmp.eq.s32.totalorder %s23, 1
      %p62 = por %p60, %p61
      %p63 = scmp.ne.s32.totalorder %s54, %s55
      %p64 = scmp.eq.s32.totalorder %s23, 0
      %p65 = por %p63, %p64
      %p66 = scmp.ne.s32.totalorder %s54, %s55
      %p67 = scmp.eq.s32.totalorder %s24, 1
      %p68 = por %p66, %p67
      %p70 = scmp.ne.s32.totalorder %s55, %s69
      %p71 = scmp.eq.s32.totalorder %s24, 0
      %p72 = por %p70, %p71
      %s74 = sadd.s32 %s73, 1
      %p77 = scmp.eq.s32.totalorder %s18, 1
      %p78 = scmp.ne.s32.totalorder %s73, %s75
      %p79 = scmp.eq.s32.totalorder %s18, 0
      %p80 = por %p78, %p79
      %p81 = scmp.ne.s32.totalorder %s73, %s75
      %p82 = scmp.eq.s32.totalorder %s23, 1
      %p83 = por %p81, %p82
      %p84 = scmp.ne.s32.totalorder %s75, %s76
      %p85 = scmp.eq.s32.totalorder %s23, 0
      %p86 = por %p84, %p85
      %p87 = scmp.ne.s32.totalorder %s75, %s76
      %p88 = scmp.eq.s32.totalorder %s24, 1
      %p89 = por %p87, %p88
      %p91 = scmp.ne.s32.totalorder %s76, %s90
      %p92 = scmp.eq.s32.totalorder %s24, 0
      %p93 = por %p91, %p92
      %s95 = sadd.s32 %s94, 1
      %p98 = scmp.eq.s32.totalorder %s18, 1
      %p99 = scmp.ne.s32.totalorder %s94, %s96
      %p100 = scmp.eq.s32.totalorder %s18, 0
      %p101 = por %p99, %p100
      %p102 = scmp.ne.s32.totalorder %s94, %s96
      %p103 = scmp.eq.s32.totalorder %s23, 1
      %p104 = por %p102, %p103
      %p105 = scmp.ne.s32.totalorder %s96, %s97
      %p106 = scmp.eq.s32.totalorder %s23, 0
      %p107 = por %p105, %p106
      %p108 = scmp.ne.s32.totalorder %s96, %s97
      %p109 = scmp.eq.s32.totalorder %s24, 1
      %p110 = por %p108, %p109
      %p112 = scmp.ne.s32.totalorder %s97, %s111
      %p113 = scmp.eq.s32.totalorder %s24, 0
      %p114 = por %p112, %p113
      %s116 = sadd.s32 %s115, 1
      %p119 = scmp.eq.s32.totalorder %s18, 1
      %p120 = scmp.ne.s32.totalorder %s115, %s117
      %p121 = scmp.eq.s32.totalorder %s18, 0
      %p122 = por %p120, %p121
      %p123 = scmp.ne.s32.totalorder %s115, %s117
      %p124 = scmp.eq.s32.totalorder %s23, 1
      %p125 = por %p123, %p124
      %p126 = scmp.ne.s32.totalorder %s117, %s118
      %p127 = scmp.eq.s32.totalorder %s23, 0
      %p128 = por %p126, %p127
      %p129 = scmp.ne.s32.totalorder %s117, %s118
      %p130 = scmp.eq.s32.totalorder %s24, 1
      %p131 = por %p129, %p130
      %p133 = scmp.ne.s32.totalorder %s118, %s132
      %p134 = scmp.eq.s32.totalorder %s24, 0
      %p135 = por %p133, %p134
      %s136 = ssub.s32 %s18, %s25
      %p137 = scmp.eq.s32.totalorder %s136, 0
      %s139 = sadd.s32 %s138, 1
      %s140 = scalar_select %p137, %s138, %s139
      %p143 = pneg %p137
      %p144 = scmp.eq.s32.totalorder %s18, 1
      %p145 = por %p143, %p144
      %p146 = scmp.ne.s32.totalorder %s138, %s141
      %p147 = scmp.eq.s32.totalorder %s18, 0
      %p148 = por %p146, %p147
      %p149 = scmp.ne.s32.totalorder %s138, %s141
      %p150 = scmp.eq.s32.totalorder %s23, 1
      %p151 = por %p149, %p150
      %p152 = scmp.ne.s32.totalorder %s141, %s142
      %p153 = scmp.eq.s32.totalorder %s23, 0
      %p154 = por %p152, %p153
      %p155 = scmp.ne.s32.totalorder %s141, %s142
      %p156 = scmp.eq.s32.totalorder %s24, 1
      %p157 = por %p155, %p156
      %p159 = scmp.ne.s32.totalorder %s142, %s158
      %p160 = scmp.eq.s32.totalorder %s24, 0
      %p161 = por %p159, %p160
      %p162 = scmp.le.s32.totalorder 1, %s18
      %p163 = scmp.lt.s32.totalorder %s18, 3
      %p164 = pnand %p162, %p163
      %p165 = pneg %p164
      // Predicated region
      $region9: #{tpu_custom_call.1} parent=5 // pred_check
        _
      $region10: #{tpu_custom_call.1} parent=5 // pred_check_branch
        %167 = sbr.rel (%p164) target = $region12
      $region11: #{tpu_custom_call.1} parent=5 // pred_region
        %s168 = ssub.s32 %s18, 1
        // Predicated region
        $region13: #{tpu_custom_call.1} parent=11 // pred_check
          %p169 = pneg %p65
        $region14: #{tpu_custom_call.1} parent=11 // pred_check_branch
          %171 = sbr.rel (%p169) target = $region16
        $region15: #{tpu_custom_call.1} parent=11 // pred_region
          %173 = vsyncadd [#allocation6], 0
          %s174 = sshll.u32 %s1, 4
          %s175 = int_to_ptr.hbm [resolvable:$true] %s174
          %s176 = sshll.u32 [#allocation5], 4
          %s177 = int_to_ptr.vmem [resolvable:$true] %s176
          %182 = dma.hbm_to_vmem [thread:$0]  %s175, 512, %s177, [#allocation6], 128, 128, 8
        $region16: #{tpu_custom_call.1} parent=11 // pred_fallthru
          _
        // Predicated region
        $region17: #{tpu_custom_call.1} parent=11 // pred_check
          %p183 = pneg %p86
        $region18: #{tpu_custom_call.1} parent=11 // pred_check_branch
          %185 = sbr.rel (%p183) target = $region20
        $region19: #{tpu_custom_call.1} parent=11 // pred_region
          _
        $region20: #{tpu_custom_call.1} parent=11 // pred_fallthru
          _
        // Predicated region
        $region21: #{tpu_custom_call.1} parent=11 // pred_check
          %p186 = pneg %p107
        $region22: #{tpu_custom_call.1} parent=11 // pred_check_branch
          %188 = sbr.rel (%p186) target = $region24
        $region23: #{tpu_custom_call.1} parent=11 // pred_region
          _
        $region24: #{tpu_custom_call.1} parent=11 // pred_fallthru
          _
        // Predicated region
        $region25: #{tpu_custom_call.1} parent=11 // pred_check
          %p189 = pneg %p128
        $region26: #{tpu_custom_call.1} parent=11 // pred_check_branch
          %191 = sbr.rel (%p189) target = $region28
        $region27: #{tpu_custom_call.1} parent=11 // pred_region
          _
        $region28: #{tpu_custom_call.1} parent=11 // pred_fallthru
          _
      $region12: #{tpu_custom_call.1} parent=5 // pred_fallthru
        _
      %p192 = scmp.lt.s32.totalorder %s18, 2
      // Predicated region
      $region29: #{tpu_custom_call.1} parent=5 // pred_check
        %p193 = pneg %p192
      $region30: #{tpu_custom_call.1} parent=5 // pred_check_branch
        %195 = sbr.rel (%p193) target = $region32
      $region31: #{tpu_custom_call.1} parent=5 // pred_region
        // Predicated region
        $region33: #{tpu_custom_call.1} parent=31 // pred_check
          %p196 = pneg %p38
        $region34: #{tpu_custom_call.1} parent=31 // pred_check_branch
          %198 = sbr.rel (%p196) target = $region36
        $region35: #{tpu_custom_call.1} parent=31 // pred_region
          %s199 = sand.u32 %s28, 1
          %s200 = scalar_lea.sflag [#allocation3], %s199
          %s201 = sand.u32 %s28, 1
          %s202 = smul.addr %s201, 8
          %s203 = scalar_lea.vmem [#allocation2], %s202
          %205 = vsyncadd %s200, 0
          %s206 = smul.addr %s18, 8
          %s207 = scalar_lea.hbm %s0, %s206
          %s209 = sshll.u32 %s207, 4
          %s210 = int_to_ptr.hbm [resolvable:$true] %s209
          %s211 = sshll.u32 %s203, 4
          %s212 = int_to_ptr.vmem [resolvable:$true] %s211
          %214 = dma.hbm_to_vmem [thread:$0]  %s210, 128, %s212, %s200
        $region36: #{tpu_custom_call.1} parent=31 // pred_fallthru
          _
      $region32: #{tpu_custom_call.1} parent=5 // pred_fallthru
        _
      %p215 = scmp.le.s32.totalorder 1, %s18
      %p216 = scmp.lt.s32.totalorder %s18, 3
      %p217 = pnand %p215, %p216
      %p218 = pneg %p217
      // Predicated region
      $region37: #{tpu_custom_call.1} parent=5 // pred_check
        _
      $region38: #{tpu_custom_call.1} parent=5 // pred_check_branch
        %220 = sbr.rel (%p217) target = $region40
      $region39: #{tpu_custom_call.1} parent=5 // pred_region
        %s221 = ssub.s32 %s18, 1
        %s222 = sand.u32 %s31, 1
        %s223 = scalar_lea.sflag [#allocation3], %s222
        %s224 = sand.u32 %s31, 1
        %s225 = smul.addr %s224, 8
        %s226 = scalar_lea.vmem [#allocation2], %s225
        // Predicated region
        $region41: #{tpu_custom_call.1} parent=39 // pred_check
          %p227 = pneg %p44
        $region42: #{tpu_custom_call.1} parent=39 // pred_check_branch
          %229 = sbr.rel (%p227) target = $region44
        $region43: #{tpu_custom_call.1} parent=39 // pred_region
          %231 = dma.done %s223, 128
        $region44: #{tpu_custom_call.1} parent=39 // pred_fallthru
          _
        // Predicated region
        $region45: #{tpu_custom_call.1} parent=39 // pred_check
          %p232 = pneg %p65
        $region46: #{tpu_custom_call.1} parent=39 // pred_check_branch
          %234 = sbr.rel (%p232) target = $region48
        $region47: #{tpu_custom_call.1} parent=39 // pred_region
          %236 = dma.done [#allocation6], 512
        $region48: #{tpu_custom_call.1} parent=39 // pred_fallthru
          _
        %s237 = sand.u32 %s31, 1
        %s238 = scalar_lea.sflag [#allocation3], %s237
        %s239 = sand.u32 %s31, 1
        %s240 = smul.addr %s239, 8
        %s241 = scalar_lea.vmem [#allocation2], %s240
        %p242 = pneg %p44
        %p243 = pneg %p41
        %p244 = pneg %p65
        %p245 = pneg %p62
        %p246 = pneg %p86
        %p247 = pneg %p83
        %p248 = pneg %p107
        %p249 = pneg %p104
        %p250 = pneg %p128
        %p251 = pneg %p125
        %p252 = pneg %p154
        %p253 = pneg %p151
        %s254 = sand.u32 %s141, 1
        %s255 = scalar_lea.sflag [#allocation4], %s254
        %s256 = sand.u32 %s141, 1
        %s257 = smul.addr %s256, 8
        %s258 = scalar_lea.vmem [#allocation7], %s257
        %v259 = vld [vmem:[%s226] sm:$0xff]
        %v260 = vld [vmem:[#allocation5] sm:$0xff]
        %v261 = vld [vmem:[#allocation5 + $0x8] sm:$0xff]
        %v262 = vld [vmem:[#allocation5 + $0x10] sm:$0xff]
        %v263 = vld [vmem:[#allocation5 + $0x18] sm:$0xff]
        %v264 = vld [vmem:[%s2] sm:$0x1]
        %v266 = vperm.slane %v264, 0
        %vm268 = vcmask 261120
        %v270 = vsel %vm268, %v259, 0
        %272 = vmatpush.msra.mxu0 0.0
        %273 = vmatpush.msra.mxu0 0.0
        %274 = vmatpush.msra.mxu0 0.0
        %275 = vmatpush.msra.mxu0 0.0
        %276 = vmatpush.msra.mxu0 0.0
        %277 = vmatpush.msra.mxu0 0.0
        %278 = vmatpush.msra.mxu0 0.0
        %279 = vmatpush.msra.mxu0 0.0
        %280 = vmatpush.msra.mxu0 0.0
        %281 = vmatpush.msra.mxu0 0.0
        %282 = vmatpush.msra.mxu0 0.0
        %283 = vmatpush.msra.mxu0 0.0
        %284 = vmatpush.msra.mxu0 %v263
        %285 = vmatpush.msra.mxu0 %v262
        %286 = vmatpush.msra.mxu0 %v261
        %287 = vmatpush.msra.mxu0 %v260
        %288 = vmatmul.f32.gmra.mxu0 %v270
        %v289 = vpop.f32.mrf.mxu0
        %v290 = vadd.f32 %v266, %v289
        %291 = vdwg.mxu0
        %v292 = vmul.f32 %v290, 0.5
        %v293 = vmul.f32 %v290, 0.044715
        %v294 = vmul.f32 %v293, %v290
        %v295 = vmul.f32 %v294, %v290
        %v296 = vadd.f32 %v290, %v295
        %v297 = vmul.f32 %v296, 0.7978846
        %v298 = vtanh.pop %v297
        %v299 = vadd.f32 %v298, 1.0
        %v300 = vmul.f32 %v292, %v299
        %v301 = vsel %vm268, %v300, 0.0
        %302 = vadd.xlane.f32.xlu0 %v301
        %v303 = vpop.xlane.xlu0 %302
        %v304 = vmul.f32 %v300, %v300
        %v305 = vsel %vm268, %v304, 0.0
        %306 = vadd.xlane.f32.xlu0 %v305
        %v307 = vpop.xlane.xlu0 %306
        %v308 = vmul.f32 %v303, 0.03125
        %v309 = vmul.f32 %v307, 0.03125
        %v310 = vmul.f32 %v308, %v308
        %v311 = vsub.f32 %v309, %v310
        %v312 = vmax.f32 %v311, 0.0
        %v313 = vsub.f32 %v300, %v308
        %v314 = vadd.f32 %v312, 1e-12
        %v315 = vrsqrt.pop %v314
        %v316 = vmul.f32 %v315, %v314
        %v317 = vmul.f32 %v316, %v315
        %v318 = vmul.f32 0.5, %v317
        %v319 = vsub.f32 1.5, %v318
        %v320 = vmul.f32 %v315, %v319
        %vm321 = vweird.f32 %v314
        %vm322 = vweird.f32 %v315
        %vm323 = vmor %vm321, %vm322
        %v324 = vsel %vm323, %v315, %v320
        %v325 = vmul.f32 %v313, %v324
        %v326 = vld [vmem:[%s3] sm:$0x1]
        %v328 = vperm.slane %v326, 0
        %v330 = vmul.f32 %v325, %v328
        %v331 = vld [vmem:[%s4] sm:$0x1]
        %v333 = vperm.slane %v331, 0
        %v335 = vadd.f32 %v330, %v333
        %336 = vst.msk [vmem:[%s258] sm:$0xff] %vm268, %v335
        %s337 = sand.u32 %s141, 1
        %s338 = scalar_lea.sflag [#allocation4], %s337
        %s339 = sand.u32 %s141, 1
        %s340 = smul.addr %s339, 8
        %s341 = scalar_lea.vmem [#allocation7], %s340
        // Predicated region
        $region49: #{tpu_custom_call.1} parent=39 // pred_check
          %p342 = pneg %p151
        $region50: #{tpu_custom_call.1} parent=39 // pred_check_branch
          %344 = sbr.rel (%p342) target = $region52
        $region51: #{tpu_custom_call.1} parent=39 // pred_region
          %346 = vsyncadd %s338, 0
          %s347 = smul.addr %s23, 8
          %s348 = scalar_lea.hbm %s5, %s347
          %s350 = sshll.u32 %s341, 4
          %s351 = int_to_ptr.vmem [resolvable:$true] %s350
          %s352 = sshll.u32 %s348, 4
          %s353 = int_to_ptr.hbm [resolvable:$true] %s352
          %355 = dma.vmem_to_hbm [thread:$0]  %s351, 128, %s353, %s338
        $region52: #{tpu_custom_call.1} parent=39 // pred_fallthru
          _
      $region40: #{tpu_custom_call.1} parent=5 // pred_fallthru
        _
      %p356 = scmp.le.s32.totalorder 2, %s18
      // Predicated region
      $region53: #{tpu_custom_call.1} parent=5 // pred_check
        %p357 = pneg %p356
      $region54: #{tpu_custom_call.1} parent=5 // pred_check_branch
        %359 = sbr.rel (%p357) target = $region56
      $region55: #{tpu_custom_call.1} parent=5 // pred_region
        %s360 = ssub.s32 %s18, 2
        // Predicated region
        $region57: #{tpu_custom_call.1} parent=55 // pred_check
          %p361 = pneg %p157
        $region58: #{tpu_custom_call.1} parent=55 // pred_check_branch
          %363 = sbr.rel (%p361) target = $region60
        $region59: #{tpu_custom_call.1} parent=55 // pred_region
          %s364 = sand.u32 %s142, 1
          %s365 = scalar_lea.sflag [#allocation4], %s364
          %s366 = sand.u32 %s142, 1
          %s367 = smul.addr %s366, 8
          %s368 = scalar_lea.vmem [#allocation7], %s367
          %370 = dma.done %s365, 128
        $region60: #{tpu_custom_call.1} parent=55 // pred_fallthru
          _
      $region56: #{tpu_custom_call.1} parent=5 // pred_fallthru
        _
    $region6: #{tpu_custom_call.1} parent=1 // loop_footer
      %s22 = sadd.s32 1, %s18
    $region7: #{tpu_custom_call.1} parent=1 // loop_footer_branch
      %17 = sbr.rel target = $region3
    $region8: #{tpu_custom_call.1} parent=1 // loop_exit
      _
    %371 = vsyncpa [#allocation3], 1
    %s372 = scalar_lea.sflag [#allocation3], 1
    %373 = vsyncpa %s372, 1
    %374 = vsyncpa [#allocation6], 1
    %375 = vsyncpa [#allocation4], 1
    %s376 = scalar_lea.sflag [#allocation4], 1
    %377 = vsyncpa %s376, 1

// kernel: tpu_custom_call.1
$region0: #{tpu_custom_call.1}
  #allocation0 [shape = 'u32[]', space=smem, size = 0x4, offset = 0x4, fixed_abs, tag = 'smem constant byte address 0x4 - core index']
  #allocation1 [shape = 'u32[72,128]{1,0:T(1,128)}', space=vmem, size = 0x9000, scoped, tag = 'internal scratch']
  %s0 = inlined_call_operand.hbm [shape: f32[16,32], index: 0, kind: input, shape index: {}]
  %s1 = inlined_call_operand.hbm [shape: f32[32,32], index: 1, kind: input, shape index: {}]
  %s2 = inlined_call_operand.vmem [shape: f32[1,32], index: 2, kind: input, shape index: {}]
  %s3 = inlined_call_operand.vmem [shape: f32[1,32], index: 3, kind: input, shape index: {}]
  %s4 = inlined_call_operand.vmem [shape: f32[1,32], index: 4, kind: input, shape index: {}]
  %s5 = inlined_call_operand.hbm [shape: f32[16,32], index: 5, kind: output, shape index: {}]
  %s6 = sld [smem:[#allocation0]]
  $region61: #{tpu_custom_call.1} parent=0
    _
  %s8 = ssub.s32 1, %s6
  %s9 = scalar_select 0, %s8, %s6
  $region1: #{tpu_custom_call.1} parent=0
    #allocation2 [shape = 'u8[8192]{0}', space=vmem, size = 0x2000, scoped, tag = 'input window, operand 0']
    #allocation3 [shape = 's32[2]{0}', space=sflag, size = 0x8, scoped, tag = 'scoped memory for tpu_custom_call.1']
    #allocation4 [shape = 's32[2]{0}', space=sflag, size = 0x8, scoped, tag = 'scoped memory for tpu_custom_call.1']
    #allocation5 [shape = 'u8[16384]{0}', space=vmem, size = 0x4000, scoped, tag = 'input window, operand 1, single buffered']
    #allocation6 [shape = 's32[1]{0}', space=sflag, size = 0x4, scoped, tag = 'scoped memory for tpu_custom_call.1']
    #allocation7 [shape = 'u8[8192]{0}', space=vmem, size = 0x2000, scoped, tag = 'output window, operand 0']
    %10 = vsyncpa [#allocation3], 0
    %s11 = scalar_lea.sflag [#allocation3], 1
    %12 = vsyncpa %s11, 0
    %13 = vsyncpa [#allocation6], 0
    %14 = vsyncpa [#allocation4], 0
    %s15 = scalar_lea.sflag [#allocation4], 1
    %16 = vsyncpa %s15, 0
    loop: start=0, step=1, limit=4
    $region2: #{tpu_custom_call.1} parent=1 // loop_pre_header
      _
    $region3: #{tpu_custom_call.1} parent=1 // loop_header
      %s18 = sphi 0, %s22
      %p19 = scmp.ge.s32.totalorder %s18, 4
      %s28 = sphi 0, %s30
      %s31 = sphi 0, %s28
      %s32 = sphi 0, %s31
      %s48 = sphi 0, %s32
      %s52 = sphi 0, %s52
      %s54 = sphi 0, %s52
      %s55 = sphi 0, %s54
      %s69 = sphi 0, %s55
      %s73 = sphi 0, %s73
      %s75 = sphi 0, %s73
      %s76 = sphi 0, %s75
      %s90 = sphi 0, %s76
      %s94 = sphi 0, %s94
      %s96 = sphi 0, %s94
      %s97 = sphi 0, %s96
      %s111 = sphi 0, %s97
      %s115 = sphi 0, %s115
      %s117 = sphi 0, %s115
      %s118 = sphi 0, %s117
      %s132 = sphi 0, %s118
      %s138 = sphi 0, %s140
      %s141 = sphi 0, %s138
      %s142 = sphi 0, %s141
      %s158 = sphi 0, %s142
    $region4: #{tpu_custom_call.1} parent=1 // loop_header_branch
      %21 = sbr.rel (%p19) target = $region8
    $region5: #{tpu_custom_call.1} parent=1 // loop_body
      %s23 = ssub.s32 %s18, 1
      %s24 = ssub.s32 %s18, 2
      %s25 = sadd.s32 %s18, 1
      %s26 = ssub.s32 %s18, %s25
      %p27 = scmp.eq.s32.totalorder %s26, 0
      %s29 = sadd.s32 %s28, 1
      %s30 = scalar_select %p27, %s28, %s29
      %p33 = pneg %p27
      %p34 = scmp.eq.s32.totalorder %s18, 1
      %p35 = por %p33, %p34
      %p36 = scmp.ne.s32.totalorder %s28, %s31
      %p37 = scmp.eq.s32.totalorder %s18, 0
      %p38 = por %p36, %p37
      %p39 = scmp.ne.s32.totalorder %s28, %s31
      %p40 = scmp.eq.s32.totalorder %s23, 1
      %p41 = por %p39, %p40
      %p42 = scmp.ne.s32.totalorder %s31, %s32
      %p43 = scmp.eq.s32.totalorder %s23, 0
      %p44 = por %p42, %p43
      %p45 = scmp.ne.s32.totalorder %s31, %s32
      %p46 = scmp.eq.s32.totalorder %s24, 1
      %p47 = por %p45, %p46
      %p49 = scmp.ne.s32.totalorder %s32, %s48
      %p50 = scmp.eq.s32.totalorder %s24, 0
      %p51 = por %p49, %p50
      %s53 = sadd.s32 %s52, 1
      %p56 = scmp.eq.s32.totalorder %s18, 1
      %p57 = scmp.ne.s32.totalorder %s52, %s54
      %p58 = scmp.eq.s32.totalorder %s18, 0
      %p59 = por %p57, %p58
      %p60 = scmp.ne.s32.totalorder %s52, %s54
      %p61 = scmp.eq.s32.totalorder %s23, 1
      %p62 = por %p60, %p61
      %p63 = scmp.ne.s32.totalorder %s54, %s55
      %p64 = scmp.eq.s32.totalorder %s23, 0
      %p65 = por %p63, %p64
      %p66 = scmp.ne.s32.totalorder %s54, %s55
      %p67 = scmp.eq.s32.totalorder %s24, 1
      %p68 = por %p66, %p67
      %p70 = scmp.ne.s32.totalorder %s55, %s69
      %p71 = scmp.eq.s32.totalorder %s24, 0
      %p72 = por %p70, %p71
      %s74 = sadd.s32 %s73, 1
      %p77 = scmp.eq.s32.totalorder %s18, 1
      %p78 = scmp.ne.s32.totalorder %s73, %s75
      %p79 = scmp.eq.s32.totalorder %s18, 0
      %p80 = por %p78, %p79
      %p81 = scmp.ne.s32.totalorder %s73, %s75
      %p82 = scmp.eq.s32.totalorder %s23, 1
      %p83 = por %p81, %p82
      %p84 = scmp.ne.s32.totalorder %s75, %s76
      %p85 = scmp.eq.s32.totalorder %s23, 0
      %p86 = por %p84, %p85
      %p87 = scmp.ne.s32.totalorder %s75, %s76
      %p88 = scmp.eq.s32.totalorder %s24, 1
      %p89 = por %p87, %p88
      %p91 = scmp.ne.s32.totalorder %s76, %s90
      %p92 = scmp.eq.s32.totalorder %s24, 0
      %p93 = por %p91, %p92
      %s95 = sadd.s32 %s94, 1
      %p98 = scmp.eq.s32.totalorder %s18, 1
      %p99 = scmp.ne.s32.totalorder %s94, %s96
      %p100 = scmp.eq.s32.totalorder %s18, 0
      %p101 = por %p99, %p100
      %p102 = scmp.ne.s32.totalorder %s94, %s96
      %p103 = scmp.eq.s32.totalorder %s23, 1
      %p104 = por %p102, %p103
      %p105 = scmp.ne.s32.totalorder %s96, %s97
      %p106 = scmp.eq.s32.totalorder %s23, 0
      %p107 = por %p105, %p106
      %p108 = scmp.ne.s32.totalorder %s96, %s97
      %p109 = scmp.eq.s32.totalorder %s24, 1
      %p110 = por %p108, %p109
      %p112 = scmp.ne.s32.totalorder %s97, %s111
      %p113 = scmp.eq.s32.totalorder %s24, 0
      %p114 = por %p112, %p113
      %s116 = sadd.s32 %s115, 1
      %p119 = scmp.eq.s32.totalorder %s18, 1
      %p120 = scmp.ne.s32.totalorder %s115, %s117
      %p121 = scmp.eq.s32.totalorder %s18, 0
      %p122 = por %p120, %p121
      %p123 = scmp.ne.s32.totalorder %s115, %s117
      %p124 = scmp.eq.s32.totalorder %s23, 1
      %p125 = por %p123, %p124
      %p126 = scmp.ne.s32.totalorder %s117, %s118
      %p127 = scmp.eq.s32.totalorder %s23, 0
      %p128 = por %p126, %p127
      %p129 = scmp.ne.s32.totalorder %s117, %s118
      %p130 = scmp.eq.s32.totalorder %s24, 1
      %p131 = por %p129, %p130
      %p133 = scmp.ne.s32.totalorder %s118, %s132
      %p134 = scmp.eq.s32.totalorder %s24, 0
      %p135 = por %p133, %p134
      %s136 = ssub.s32 %s18, %s25
      %p137 = scmp.eq.s32.totalorder %s136, 0
      %s139 = sadd.s32 %s138, 1
      %s140 = scalar_select %p137, %s138, %s139
      %p143 = pneg %p137
      %p144 = scmp.eq.s32.totalorder %s18, 1
      %p145 = por %p143, %p144
      %p146 = scmp.ne.s32.totalorder %s138, %s141
      %p147 = scmp.eq.s32.totalorder %s18, 0
      %p148 = por %p146, %p147
      %p149 = scmp.ne.s32.totalorder %s138, %s141
      %p150 = scmp.eq.s32.totalorder %s23, 1
      %p151 = por %p149, %p150
      %p152 = scmp.ne.s32.totalorder %s141, %s142
      %p153 = scmp.eq.s32.totalorder %s23, 0
      %p154 = por %p152, %p153
      %p155 = scmp.ne.s32.totalorder %s141, %s142
      %p156 = scmp.eq.s32.totalorder %s24, 1
      %p157 = por %p155, %p156
      %p159 = scmp.ne.s32.totalorder %s142, %s158
      %p160 = scmp.eq.s32.totalorder %s24, 0
      %p161 = por %p159, %p160
      %p162 = scmp.le.s32.totalorder 1, %s18
      %p163 = scmp.lt.s32.totalorder %s18, 3
      %p164 = pnand %p162, %p163
      %p165 = pneg %p164
      // Predicated region
      $region9: #{tpu_custom_call.1} parent=5 // pred_check
        _
      $region10: #{tpu_custom_call.1} parent=5 // pred_check_branch
        %167 = sbr.rel (%p164) target = $region12
      $region11: #{tpu_custom_call.1} parent=5 // pred_region
        %s168 = ssub.s32 %s18, 1
        // Predicated region
        $region13: #{tpu_custom_call.1} parent=11 // pred_check
          %p169 = pneg %p65
        $region14: #{tpu_custom_call.1} parent=11 // pred_check_branch
          %171 = sbr.rel (%p169) target = $region16
        $region15: #{tpu_custom_call.1} parent=11 // pred_region
          %173 = vsyncadd [#allocation6], 0
          %s174 = sshll.u32 %s1, 4
          %s175 = int_to_ptr.hbm [resolvable:$true] %s174
          %s176 = sshll.u32 [#allocation5], 4
          %s177 = int_to_ptr.vmem [resolvable:$true] %s176
          %182 = dma.hbm_to_vmem [thread:$0]  %s175, 512, %s177, [#allocation6], 128, 128, 8
        $region16: #{tpu_custom_call.1} parent=11 // pred_fallthru
          _
        // Predicated region
        $region17: #{tpu_custom_call.1} parent=11 // pred_check
          %p183 = pneg %p86
        $region18: #{tpu_custom_call.1} parent=11 // pred_check_branch
          %185 = sbr.rel (%p183) target = $region20
        $region19: #{tpu_custom_call.1} parent=11 // pred_region
          _
        $region20: #{tpu_custom_call.1} parent=11 // pred_fallthru
          _
        // Predicated region
        $region21: #{tpu_custom_call.1} parent=11 // pred_check
          %p186 = pneg %p107
        $region22: #{tpu_custom_call.1} parent=11 // pred_check_branch
          %188 = sbr.rel (%p186) target = $region24
        $region23: #{tpu_custom_call.1} parent=11 // pred_region
          _
        $region24: #{tpu_custom_call.1} parent=11 // pred_fallthru
          _
        // Predicated region
        $region25: #{tpu_custom_call.1} parent=11 // pred_check
          %p189 = pneg %p128
        $region26: #{tpu_custom_call.1} parent=11 // pred_check_branch
          %191 = sbr.rel (%p189) target = $region28
        $region27: #{tpu_custom_call.1} parent=11 // pred_region
          _
        $region28: #{tpu_custom_call.1} parent=11 // pred_fallthru
          _
      $region12: #{tpu_custom_call.1} parent=5 // pred_fallthru
        _
      %p192 = scmp.lt.s32.totalorder %s18, 2
      // Predicated region
      $region29: #{tpu_custom_call.1} parent=5 // pred_check
        %p193 = pneg %p192
      $region30: #{tpu_custom_call.1} parent=5 // pred_check_branch
        %195 = sbr.rel (%p193) target = $region32
      $region31: #{tpu_custom_call.1} parent=5 // pred_region
        // Predicated region
        $region33: #{tpu_custom_call.1} parent=31 // pred_check
          %p196 = pneg %p38
        $region34: #{tpu_custom_call.1} parent=31 // pred_check_branch
          %198 = sbr.rel (%p196) target = $region36
        $region35: #{tpu_custom_call.1} parent=31 // pred_region
          %s199 = sand.u32 %s28, 1
          %s200 = scalar_lea.sflag [#allocation3], %s199
          %s201 = sand.u32 %s28, 1
          %s202 = smul.addr %s201, 8
          %s203 = scalar_lea.vmem [#allocation2], %s202
          %205 = vsyncadd %s200, 0
          %s206 = smul.addr %s18, 8
          %s207 = scalar_lea.hbm %s0, %s206
          %s209 = sshll.u32 %s207, 4
          %s210 = int_to_ptr.hbm [resolvable:$true] %s209
          %s211 = sshll.u32 %s203, 4
          %s212 = int_to_ptr.vmem [resolvable:$true] %s211
          %214 = dma.hbm_to_vmem [thread:$0]  %s210, 128, %s212, %s200
        $region36: #{tpu_custom_call.1} parent=31 // pred_fallthru
          _
      $region32: #{tpu_custom_call.1} parent=5 // pred_fallthru
        _
      %p215 = scmp.le.s32.totalorder 1, %s18
      %p216 = scmp.lt.s32.totalorder %s18, 3
      %p217 = pnand %p215, %p216
      %p218 = pneg %p217
      // Predicated region
      $region37: #{tpu_custom_call.1} parent=5 // pred_check
        _
      $region38: #{tpu_custom_call.1} parent=5 // pred_check_branch
        %220 = sbr.rel (%p217) target = $region40
      $region39: #{tpu_custom_call.1} parent=5 // pred_region
        %s221 = ssub.s32 %s18, 1
        %s222 = sand.u32 %s31, 1
        %s223 = scalar_lea.sflag [#allocation3], %s222
        %s224 = sand.u32 %s31, 1
        %s225 = smul.addr %s224, 8
        %s226 = scalar_lea.vmem [#allocation2], %s225
        // Predicated region
        $region41: #{tpu_custom_call.1} parent=39 // pred_check
          %p227 = pneg %p44
        $region42: #{tpu_custom_call.1} parent=39 // pred_check_branch
          %229 = sbr.rel (%p227) target = $region44
        $region43: #{tpu_custom_call.1} parent=39 // pred_region
          %231 = dma.done %s223, 128
        $region44: #{tpu_custom_call.1} parent=39 // pred_fallthru
          _
        // Predicated region
        $region45: #{tpu_custom_call.1} parent=39 // pred_check
          %p232 = pneg %p65
        $region46: #{tpu_custom_call.1} parent=39 // pred_check_branch
          %234 = sbr.rel (%p232) target = $region48
        $region47: #{tpu_custom_call.1} parent=39 // pred_region
          %236 = dma.done [#allocation6], 512
        $region48: #{tpu_custom_call.1} parent=39 // pred_fallthru
          _
        %s237 = sand.u32 %s31, 1
        %s238 = scalar_lea.sflag [#allocation3], %s237
        %s239 = sand.u32 %s31, 1
        %s240 = smul.addr %s239, 8
        %s241 = scalar_lea.vmem [#allocation2], %s240
        %p242 = pneg %p44
        %p243 = pneg %p41
        %p244 = pneg %p65
        %p245 = pneg %p62
        %p246 = pneg %p86
        %p247 = pneg %p83
        %p248 = pneg %p107
        %p249 = pneg %p104
        %p250 = pneg %p128
        %p251 = pneg %p125
        %p252 = pneg %p154
        %p253 = pneg %p151
        %s254 = sand.u32 %s141, 1
        %s255 = scalar_lea.sflag [#allocation4], %s254
        %s256 = sand.u32 %s141, 1
        %s257 = smul.addr %s256, 8
        %s258 = scalar_lea.vmem [#allocation7], %s257
        %v259 = vld [vmem:[%s226] sm:$0xff]
        %v260 = vld [vmem:[#allocation5] sm:$0xff]
        %v261 = vld [vmem:[#allocation5 + $0x8] sm:$0xff]
        %v262 = vld [vmem:[#allocation5 + $0x10] sm:$0xff]
        %v263 = vld [vmem:[#allocation5 + $0x18] sm:$0xff]
        %v264 = vld [vmem:[%s2] sm:$0x1]
        %v266 = vperm.slane %v264, 0
        %vm268 = vcmask 261120
        %v270 = vsel %vm268, %v259, 0
        %272 = vmatpush.msra.mxu0 0.0
        %273 = vmatpush.msra.mxu0 0.0
        %274 = vmatpush.msra.mxu0 0.0
        %275 = vmatpush.msra.mxu0 0.0
        %276 = vmatpush.msra.mxu0 0.0
        %277 = vmatpush.msra.mxu0 0.0
        %278 = vmatpush.msra.mxu0 0.0
        %279 = vmatpush.msra.mxu0 0.0
        %280 = vmatpush.msra.mxu0 0.0
        %281 = vmatpush.msra.mxu0 0.0
        %282 = vmatpush.msra.mxu0 0.0
        %283 = vmatpush.msra.mxu0 0.0
        %284 = vmatpush.msra.mxu0 %v263
        %285 = vmatpush.msra.mxu0 %v262
        %286 = vmatpush.msra.mxu0 %v261
        %287 = vmatpush.msra.mxu0 %v260
        %288 = vmatmul.f32.gmra.mxu0 %v270
        %v289 = vpop.f32.mrf.mxu0
        %v290 = vadd.f32 %v266, %v289
        %291 = vdwg.mxu0
        %v292 = vmul.f32 %v290, 0.5
        %v293 = vmul.f32 %v290, 0.044715
        %v294 = vmul.f32 %v293, %v290
        %v295 = vmul.f32 %v294, %v290
        %v296 = vadd.f32 %v290, %v295
        %v297 = vmul.f32 %v296, 0.7978846
        %v298 = vtanh.pop %v297
        %v299 = vadd.f32 %v298, 1.0
        %v300 = vmul.f32 %v292, %v299
        %v301 = vsel %vm268, %v300, 0.0
        %302 = vadd.xlane.f32.xlu0 %v301
        %v303 = vpop.xlane.xlu0 %302
        %v304 = vmul.f32 %v300, %v300
        %v305 = vsel %vm268, %v304, 0.0
        %306 = vadd.xlane.f32.xlu0 %v305
        %v307 = vpop.xlane.xlu0 %306
        %v308 = vmul.f32 %v303, 0.03125
        %v309 = vmul.f32 %v307, 0.03125
        %v310 = vmul.f32 %v308, %v308
        %v311 = vsub.f32 %v309, %v310
        %v312 = vmax.f32 %v311, 0.0
        %v313 = vsub.f32 %v300, %v308
        %v314 = vadd.f32 %v312, 1e-12
        %v315 = vrsqrt.pop %v314
        %v316 = vmul.f32 %v315, %v314
        %v317 = vmul.f32 %v316, %v315
        %v318 = vmul.f32 0.5, %v317
        %v319 = vsub.f32 1.5, %v318
        %v320 = vmul.f32 %v315, %v319
        %vm321 = vweird.f32 %v314
        %vm322 = vweird.f32 %v315
        %vm323 = vmor %vm321, %vm322
        %v324 = vsel %vm323, %v315, %v320
        %v325 = vmul.f32 %v313, %v324
        %v326 = vld [vmem:[%s3] sm:$0x1]
        %v328 = vperm.slane %v326, 0
        %v330 = vmul.f32 %v325, %v328
        %v331 = vld [vmem:[%s4] sm:$0x1]
        %v333 = vperm.slane %v331, 0
        %v335 = vadd.f32 %v330, %v333
        %336 = vst.msk [vmem:[%s258] sm:$0xff] %vm268, %v335
        %s337 = sand.u32 %s141, 1
        %s338 = scalar_lea.sflag [#allocation4], %s337
        %s339 = sand.u32 %s141, 1
        %s340 = smul.addr %s339, 8
        %s341 = scalar_lea.vmem [#allocation7], %s340
        // Predicated region
        $region49: #{tpu_custom_call.1} parent=39 // pred_check
          %p342 = pneg %p151
        $region50: #{tpu_custom_call.1} parent=39 // pred_check_branch
          %344 = sbr.rel (%p342) target = $region52
        $region51: #{tpu_custom_call.1} parent=39 // pred_region
          %346 = vsyncadd %s338, 0
          %s347 = smul.addr %s23, 8
          %s348 = scalar_lea.hbm %s5, %s347
          %s350 = sshll.u32 %s341, 4
          %s351 = int_to_ptr.vmem [resolvable:$true] %s350
          %s352 = sshll.u32 %s348, 4
          %s353 = int_to_ptr.hbm [resolvable:$true] %s352
          %355 = dma.vmem_to_hbm [thread:$0]  %s351, 128, %s353, %s338
        $region52: #{tpu_custom_call.1} parent=39 // pred_fallthru
          _
      $region40: #{tpu_custom_call.1} parent=5 // pred_fallthru
        _
      %p356 = scmp.le.s32.totalorder 2, %s18
      // Predicated region
      $region53: #{tpu_custom_call.1} parent=5 // pred_check
        %p357 = pneg %p356
      $region54: #{tpu_custom_call.1} parent=5 // pred_check_branch
        %359 = sbr.rel (%p357) target = $region56
      $region55: #{tpu_custom_call.1} parent=5 // pred_region
        %s360 = ssub.s32 %s18, 2
        // Predicated region
        $region57: #{tpu_custom_call.1} parent=55 // pred_check
          %p361 = pneg %p157
        $region58: #{tpu_custom_call.1} parent=55 // pred_check_branch
          %363 = sbr.rel (%p361) target = $region60
        $region59: #{tpu_custom_call.1} parent=55 // pred_region
          %s364 = sand.u32 %s142, 1
          %s365 = scalar_lea.sflag [#allocation4], %s364
          %s366 = sand.u32 %s142, 1
          %s367 = smul.addr %s366, 8
          %s368 = scalar_lea.vmem [#allocation7], %s367
          %370 = dma.done %s365, 128
        $region60: #{tpu_custom_call.1} parent=55 // pred_fallthru
          _
      $region56: #{tpu_custom_call.1} parent=5 // pred_fallthru
        _
    $region6: #{tpu_custom_call.1} parent=1 // loop_footer
      %s22 = sadd.s32 1, %s18
    $region7: #{tpu_custom_call.1} parent=1 // loop_footer_branch
      %17 = sbr.rel target = $region3
    $region8: #{tpu_custom_call.1} parent=1 // loop_exit
      _
    %371 = vsyncpa [#allocation3], 1
    %s372 = scalar_lea.sflag [#allocation3], 1
    %373 = vsyncpa %s372, 1
    %374 = vsyncpa [#allocation6], 1
    %375 = vsyncpa [#allocation4], 1
    %s376 = scalar_lea.sflag [#allocation4], 1
    %377 = vsyncpa %s376, 1

</llo_original>
